<compile_context>
chip_gen: v6e
topology: v6e:2x2x1
jax: 0.10.0
libtpu: 0.0.40
codegen_flags: <defaults>
</compile_context>

<pallas_src>
import functools
import math

import jax
import jax.numpy as jnp
from jax.experimental import pallas as pl
from jax.experimental.pallas import tpu as pltpu


# ---------------------------------------------------------------------------
# Path A: whole ResNormal forward fused into a single kernel (small graphs).
# Everything (x, adj, 4x(W, b)) lives in VMEM; no grid, no HBM intermediates.
# ---------------------------------------------------------------------------
def _resnormal_fused_kernel(x_ref, adj_ref,
                            w1_ref, b1_ref, w2_ref, b2_ref,
                            w3_ref, b3_ref, w4_ref, b4_ref,
                            o_ref):
    x = x_ref[...].astype(jnp.float32)
    adj = adj_ref[...].astype(jnp.float32)

    def gc(h, w_ref, b_ref, relu):
        support = jnp.dot(h, w_ref[...], preferred_element_type=jnp.float32)
        out = jnp.dot(adj, support,
                      preferred_element_type=jnp.float32) + b_ref[...]
        return jnp.maximum(out, 0.0) if relu else out

    h = gc(x, w1_ref, b1_ref, True)      # GCN1 layer 1 (+ReLU); dropout = id
    h = gc(h, w2_ref, b2_ref, False)     # GCN1 layer 2 -> cl_conv1
    g = gc(h, w3_ref, b3_ref, True)      # GCN2 layer 1 (+ReLU)
    out = gc(g, w4_ref, b4_ref, False)   # GCN2 layer 2 -> cl_conv2
    o_ref[...] = (out + x).astype(o_ref.dtype)   # ResNormal residual


def _res_normal_fused(x, adj, params):
    m, d = x.shape
    weights = [
        params["g1_w1"], params["g1_b1"].reshape(1, d),
        params["g1_w2"], params["g1_b2"].reshape(1, d),
        params["g2_w1"], params["g2_b1"].reshape(1, d),
        params["g2_w2"], params["g2_b2"].reshape(1, d),
    ]
    # No grid: whole arrays are mapped into VMEM; single kernel invocation.
    return pl.pallas_call(
        _resnormal_fused_kernel,
        out_shape=jax.ShapeDtypeStruct((m, d), jnp.float32),
    )(x, adj, *weights)


# ---------------------------------------------------------------------------
# Path B: tiled fused GraphConvolution kernel (large graphs).
#   out = relu?(adj @ (X @ W) + b) (+ residual), one pallas_call per layer.
# Grid = (M-tiles, K-tiles) over the node dimension; W/bias grid-invariant
# (VMEM-resident); the output block is K-invariant and used as the f32
# accumulator directly (no scratch).
# ---------------------------------------------------------------------------
def _gcn_layer_kernel(adj_ref, x_ref, w_ref, b_ref, *rest,
                      apply_relu, has_residual):
    if has_residual:
        res_ref, o_ref = rest
    else:
        (o_ref,) = rest
        res_ref = None

    k = pl.program_id(1)

    @pl.when(k == 0)
    def _():
        o_ref[...] = jnp.zeros_like(o_ref)

    # Support tile computed on the fly: X[k-tile] @ W  (W resident in VMEM).
    support = jnp.dot(x_ref[...], w_ref[...],
                      preferred_element_type=jnp.float32)
    # Feed straight into the adj matmul; match MXU operand dtype to adj.
    o_ref[...] += jnp.dot(adj_ref[...], support.astype(adj_ref.dtype),
                          preferred_element_type=jnp.float32)

    @pl.when(k == pl.num_programs(1) - 1)
    def _():
        out = o_ref[...] + b_ref[...]          # (tm, D) + (1, D)
        if apply_relu:
            out = jnp.maximum(out, 0.0)
        if has_residual:
            out = out + res_ref[...]
        o_ref[...] = out


def _gcn_layer_call(adj_c, x_c, w_c, b2d, *, apply_relu, residual, tile):
    mp = adj_c.shape[0]
    d = w_c.shape[1]
    tm = tk = min(tile, mp)
    assert mp % tm == 0, "padded node count must be a multiple of the tile"

    has_residual = residual is not None
    kernel = functools.partial(_gcn_layer_kernel,
                               apply_relu=apply_relu,
                               has_residual=has_residual)

    in_specs = [
        pl.BlockSpec((tm, tk), lambda i, k: (i, k)),   # adj tile
        pl.BlockSpec((tk, d), lambda i, k: (k, 0)),    # X tile
        pl.BlockSpec((d, d), lambda i, k: (0, 0)),     # W (resident)
        pl.BlockSpec((1, d), lambda i, k: (0, 0)),     # bias (resident)
    ]
    inputs = [adj_c, x_c, w_c, b2d]
    if has_residual:
        in_specs.append(pl.BlockSpec((tm, d), lambda i, k: (i, 0)))
        inputs.append(residual)

    return pl.pallas_call(
        kernel,
        out_shape=jax.ShapeDtypeStruct((mp, d), jnp.float32),
        grid=(mp // tm, mp // tk),
        in_specs=in_specs,
        out_specs=pl.BlockSpec((tm, d), lambda i, k: (i, 0)),
        compiler_params=pltpu.CompilerParams(
            dimension_semantics=("parallel", "arbitrary"),
            vmem_limit_bytes=32 * 1024 * 1024),
    )(*inputs)


def _round_up(v, mult):
    return ((v + mult - 1) // mult) * mult


def _res_normal_tiled(x, adj, params, *, tile, compute_dtype):
    m, d = x.shape
    tile = max(128, (tile // 128) * 128)   # lane/sublane aligned tile
    if m <= tile:
        mp = _round_up(m, 16)              # full-dim blocks, bf16-sublane safe
    else:
        mp = _round_up(m, tile)            # bounded (tile, tile) adj blocks
    pad = mp - m

    # Zero-pad once; padded adj columns are zero so padded rows cannot
    # contaminate real outputs when chaining layers on padded tensors.
    x_p = jnp.pad(x.astype(jnp.float32), ((0, pad), (0, 0)))
    adj_c = jnp.pad(adj, ((0, pad), (0, pad))).astype(compute_dtype)

    def layer(h, w, b, *, relu, residual=None):
        return _gcn_layer_call(
            adj_c,
            h.astype(compute_dtype),
            w.astype(compute_dtype),
            b.reshape(1, d).astype(jnp.float32),
            apply_relu=relu, residual=residual, tile=tile)

    # TODO(synk): intermediate (Mp, D) tensors have lane width D (<128) when
    # hidden_dim < 128 -> masked partial stores; a lane-dense repack (fold M
    # into lanes) would help further but is omitted for clarity.
    h = layer(x_p, params["g1_w1"], params["g1_b1"], relu=True)
    h = layer(h, params["g1_w2"], params["g1_b2"], relu=False)      # cl_conv1
    g = layer(h, params["g2_w1"], params["g2_b1"], relu=True)
    out = layer(g, params["g2_w2"], params["g2_b2"], relu=False,
                residual=x_p)                                        # + x
    return out[:m]


# ---------------------------------------------------------------------------
# Dispatch: tiny graphs -> single fully-fused kernel; otherwise tiled path.
# ---------------------------------------------------------------------------
@functools.partial(jax.jit, static_argnames=("tile", "compute_dtype"))
def res_normal_forward(x, adj, params, tile=512, compute_dtype=jnp.bfloat16):
    m, d = x.shape
    fused_bytes = 4 * (m * m + 2 * m * d + 4 * d * d + 4 * d)
    if fused_bytes <= 4 * 1024 * 1024:     # fits VMEM comfortably on all gens
        return _res_normal_fused(x, adj, params)
    return _res_normal_tiled(x, adj, params, tile=tile,
                             compute_dtype=compute_dtype)


def res_normal_ref(x, adj, p):
    """Pure-JAX reference mirroring the PyTorch forward."""
    hp = jax.lax.Precision.HIGHEST

    def layer(h, w, b):
        return jnp.dot(adj, jnp.dot(h, w, precision=hp), precision=hp) + b

    h = jax.nn.relu(layer(x, p["g1_w1"], p["g1_b1"]))
    cl_conv1 = layer(h, p["g1_w2"], p["g1_b2"])
    g = jax.nn.relu(layer(cl_conv1, p["g2_w1"], p["g2_b1"]))
    cl_conv2 = layer(g, p["g2_w2"], p["g2_b2"])
    return cl_conv2 + x


if __name__ == "__main__":
    key = jax.random.PRNGKey(0)
    num_nodes, hidden_dim = 64, 32   # args.hidden_dim = 32, small graph

    keys = jax.random.split(key, 12)
    x = jax.random.normal(keys[0], (num_nodes, hidden_dim), dtype=jnp.float32)
    a_raw = jax.random.uniform(keys[1], (num_nodes, num_nodes),
                               dtype=jnp.float32)
    adj = a_raw / jnp.sum(a_raw, axis=-1, keepdims=True)

    stdv = 1.0 / math.sqrt(hidden_dim)

    def init_w(k):
        return jax.random.uniform(k, (hidden_dim, hidden_dim), jnp.float32,
                                  -stdv, stdv)

    def init_b(k):
        return jax.random.uniform(k, (hidden_dim,), jnp.float32, -stdv, stdv)

    params = {
        "g1_w1": init_w(keys[2]), "g1_b1": init_b(keys[3]),
        "g1_w2": init_w(keys[4]), "g1_b2": init_b(keys[5]),
        "g2_w1": init_w(keys[6]), "g2_b1": init_b(keys[7]),
        "g2_w2": init_w(keys[8]), "g2_b2": init_b(keys[9]),
    }

    # --- 1. Demo size: fully-fused single-kernel path (f32) -----------------
    out = jax.block_until_ready(res_normal_forward(x, adj, params))
    ref = res_normal_ref(x, adj, params)
    assert out.shape == (num_nodes, hidden_dim)
    err = jnp.max(jnp.abs(out - ref))
    assert jnp.allclose(out, ref, atol=5e-3, rtol=5e-3), \
        f"fused path mismatch: max abs err {err}"

    # --- 2. Larger, unaligned size: tiled path (padding + multi-tile grid) --
    m2 = 300
    x2 = jax.random.normal(keys[10], (m2, hidden_dim), dtype=jnp.float32)
    a2 = jax.random.uniform(keys[11], (m2, m2), dtype=jnp.float32)
    adj2 = a2 / jnp.sum(a2, axis=-1, keepdims=True)
    ref2 = res_normal_ref(x2, adj2, params)

    # f32 tiled path (tight tolerance).
    tiled_f32 = jax.jit(functools.partial(
        _res_normal_tiled, tile=128, compute_dtype=jnp.float32))
    out2 = jax.block_until_ready(tiled_f32(x2, adj2, params))
    err2 = jnp.max(jnp.abs(out2 - ref2))
    assert jnp.allclose(out2, ref2, atol=5e-3, rtol=5e-3), \
        f"tiled f32 path mismatch: max abs err {err2}"

    # bf16 tiled path (HBM-bound adj stream halved; f32 MXU accumulation).
    tiled_bf16 = jax.jit(functools.partial(
        _res_normal_tiled, tile=128, compute_dtype=jnp.bfloat16))
    out3 = jax.block_until_ready(tiled_bf16(x2, adj2, params))
    err3 = jnp.max(jnp.abs(out3 - ref2))
    assert jnp.allclose(out3, ref2, atol=3e-2, rtol=3e-2), \
        f"tiled bf16 path mismatch: max abs err {err3}"

    print("KERNEL_OK")
</pallas_src>

<mosaic_0001>
module attributes {stable_mosaic.version = 11 : i64} {
  func.func @_resnormal_fused_kernel(%arg0: memref<64x32xf32, #tpu.memory_space<vmem>>, %arg1: memref<64x64xf32, #tpu.memory_space<vmem>>, %arg2: memref<32x32xf32, #tpu.memory_space<vmem>>, %arg3: memref<1x32xf32, #tpu.memory_space<vmem>>, %arg4: memref<32x32xf32, #tpu.memory_space<vmem>>, %arg5: memref<1x32xf32, #tpu.memory_space<vmem>>, %arg6: memref<32x32xf32, #tpu.memory_space<vmem>>, %arg7: memref<1x32xf32, #tpu.memory_space<vmem>>, %arg8: memref<32x32xf32, #tpu.memory_space<vmem>>, %arg9: memref<1x32xf32, #tpu.memory_space<vmem>>, %arg10: memref<64x32xf32, #tpu.memory_space<vmem>>) attributes {dimension_semantics = [], scalar_prefetch = 0 : i64, scratch_operands = 0 : i64, tpu.core_type = #tpu.core_type<tc>} {
    %c0 = arith.constant 0 : index
    %c0_0 = arith.constant 0 : index
    %0 = vector.load %arg0[%c0, %c0_0] : memref<64x32xf32, #tpu.memory_space<vmem>>, vector<64x32xf32>
    %c0_1 = arith.constant 0 : index
    %c0_2 = arith.constant 0 : index
    %1 = vector.load %arg1[%c0_1, %c0_2] : memref<64x64xf32, #tpu.memory_space<vmem>>, vector<64x64xf32>
    %c0_3 = arith.constant 0 : index
    %c0_4 = arith.constant 0 : index
    %2 = vector.load %arg2[%c0_3, %c0_4] : memref<32x32xf32, #tpu.memory_space<vmem>>, vector<32x32xf32>
    %cst = arith.constant dense<0.000000e+00> : vector<64x32xf32>
    %3 = tpu.matmul %0, %2, %cst {dimension_numbers = #tpu.dot_dimension_numbers<[1], [0], [0], [1], [0, 0, 1, 1], [], []>} : vector<64x32xf32>, vector<32x32xf32>, vector<64x32xf32> -> vector<64x32xf32>
    %cst_5 = arith.constant dense<0.000000e+00> : vector<64x32xf32>
    %4 = tpu.matmul %1, %3, %cst_5 {dimension_numbers = #tpu.dot_dimension_numbers<[1], [0], [0], [1], [0, 0, 1, 1], [], []>} : vector<64x64xf32>, vector<64x32xf32>, vector<64x32xf32> -> vector<64x32xf32>
    %c0_6 = arith.constant 0 : index
    %c0_7 = arith.constant 0 : index
    %5 = vector.load %arg3[%c0_6, %c0_7] : memref<1x32xf32, #tpu.memory_space<vmem>>, vector<1x32xf32>
    %6 = vector.broadcast %5 : vector<1x32xf32> to vector<64x32xf32>
    %7 = arith.addf %4, %6 : vector<64x32xf32>
    %cst_8 = arith.constant 0.000000e+00 : f32
    %8 = vector.broadcast %cst_8 : f32 to vector<64x32xf32>
    %9 = arith.maximumf %7, %8 : vector<64x32xf32>
    %c0_9 = arith.constant 0 : index
    %c0_10 = arith.constant 0 : index
    %10 = vector.load %arg4[%c0_9, %c0_10] : memref<32x32xf32, #tpu.memory_space<vmem>>, vector<32x32xf32>
    %cst_11 = arith.constant dense<0.000000e+00> : vector<64x32xf32>
    %11 = tpu.matmul %9, %10, %cst_11 {dimension_numbers = #tpu.dot_dimension_numbers<[1], [0], [0], [1], [0, 0, 1, 1], [], []>} : vector<64x32xf32>, vector<32x32xf32>, vector<64x32xf32> -> vector<64x32xf32>
    %cst_12 = arith.constant dense<0.000000e+00> : vector<64x32xf32>
    %12 = tpu.matmul %1, %11, %cst_12 {dimension_numbers = #tpu.dot_dimension_numbers<[1], [0], [0], [1], [0, 0, 1, 1], [], []>} : vector<64x64xf32>, vector<64x32xf32>, vector<64x32xf32> -> vector<64x32xf32>
    %c0_13 = arith.constant 0 : index
    %c0_14 = arith.constant 0 : index
    %13 = vector.load %arg5[%c0_13, %c0_14] : memref<1x32xf32, #tpu.memory_space<vmem>>, vector<1x32xf32>
    %14 = vector.broadcast %13 : vector<1x32xf32> to vector<64x32xf32>
    %15 = arith.addf %12, %14 : vector<64x32xf32>
    %c0_15 = arith.constant 0 : index
    %c0_16 = arith.constant 0 : index
    %16 = vector.load %arg6[%c0_15, %c0_16] : memref<32x32xf32, #tpu.memory_space<vmem>>, vector<32x32xf32>
    %cst_17 = arith.constant dense<0.000000e+00> : vector<64x32xf32>
    %17 = tpu.matmul %15, %16, %cst_17 {dimension_numbers = #tpu.dot_dimension_numbers<[1], [0], [0], [1], [0, 0, 1, 1], [], []>} : vector<64x32xf32>, vector<32x32xf32>, vector<64x32xf32> -> vector<64x32xf32>
    %cst_18 = arith.constant dense<0.000000e+00> : vector<64x32xf32>
    %18 = tpu.matmul %1, %17, %cst_18 {dimension_numbers = #tpu.dot_dimension_numbers<[1], [0], [0], [1], [0, 0, 1, 1], [], []>} : vector<64x64xf32>, vector<64x32xf32>, vector<64x32xf32> -> vector<64x32xf32>
    %c0_19 = arith.constant 0 : index
    %c0_20 = arith.constant 0 : index
    %19 = vector.load %arg7[%c0_19, %c0_20] : memref<1x32xf32, #tpu.memory_space<vmem>>, vector<1x32xf32>
    %20 = vector.broadcast %19 : vector<1x32xf32> to vector<64x32xf32>
    %21 = arith.addf %18, %20 : vector<64x32xf32>
    %cst_21 = arith.constant 0.000000e+00 : f32
    %22 = vector.broadcast %cst_21 : f32 to vector<64x32xf32>
    %23 = arith.maximumf %21, %22 : vector<64x32xf32>
    %c0_22 = arith.constant 0 : index
    %c0_23 = arith.constant 0 : index
    %24 = vector.load %arg8[%c0_22, %c0_23] : memref<32x32xf32, #tpu.memory_space<vmem>>, vector<32x32xf32>
    %cst_24 = arith.constant dense<0.000000e+00> : vector<64x32xf32>
    %25 = tpu.matmul %23, %24, %cst_24 {dimension_numbers = #tpu.dot_dimension_numbers<[1], [0], [0], [1], [0, 0, 1, 1], [], []>} : vector<64x32xf32>, vector<32x32xf32>, vector<64x32xf32> -> vector<64x32xf32>
    %cst_25 = arith.constant dense<0.000000e+00> : vector<64x32xf32>
    %26 = tpu.matmul %1, %25, %cst_25 {dimension_numbers = #tpu.dot_dimension_numbers<[1], [0], [0], [1], [0, 0, 1, 1], [], []>} : vector<64x64xf32>, vector<64x32xf32>, vector<64x32xf32> -> vector<64x32xf32>
    %c0_26 = arith.constant 0 : index
    %c0_27 = arith.constant 0 : index
    %27 = vector.load %arg9[%c0_26, %c0_27] : memref<1x32xf32, #tpu.memory_space<vmem>>, vector<1x32xf32>
    %28 = vector.broadcast %27 : vector<1x32xf32> to vector<64x32xf32>
    %29 = arith.addf %26, %28 : vector<64x32xf32>
    %30 = arith.addf %29, %0 : vector<64x32xf32>
    %c0_28 = arith.constant 0 : index
    %c0_29 = arith.constant 0 : index
    %31 = vector.load %arg10[%c0_28, %c0_29] : memref<64x32xf32, #tpu.memory_space<vmem>>, vector<64x32xf32>
    tpu.vector_store %arg10[%c0_28, %c0_29], %30 {strides = array<i32>} : memref<64x32xf32, #tpu.memory_space<vmem>>, vector<64x32xf32>,
    return
  }
}

</mosaic_0001>

<llo_original>
// kernel: res_normal_forward.1
$region0: #{res_normal_forward.1}
  #allocation0 [shape = 'u32[]', space=smem, size = 0x4, offset = 0x4, fixed_abs, tag = 'smem constant byte address 0x4 - core index']
  #allocation1 [shape = 'u32[144,128]{1,0:T(1,128)}', space=vmem, size = 0x12000, scoped, tag = 'internal scratch']
  %s0 = inlined_call_operand.vmem [shape: f32[64,32], index: 0, kind: input, shape index: {}]
  %s1 = inlined_call_operand.vmem [shape: f32[64,64], index: 1, kind: input, shape index: {}]
  %s2 = inlined_call_operand.vmem [shape: f32[32,32], index: 2, kind: input, shape index: {}]
  %s3 = inlined_call_operand.vmem [shape: f32[1,32], index: 3, kind: input, shape index: {}]
  %s4 = inlined_call_operand.hbm [shape: f32[32,32], index: 4, kind: input, shape index: {}]
  %s5 = inlined_call_operand.vmem [shape: f32[1,32], index: 5, kind: input, shape index: {}]
  %s6 = inlined_call_operand.hbm [shape: f32[32,32], index: 6, kind: input, shape index: {}]
  %s7 = inlined_call_operand.vmem [shape: f32[1,32], index: 7, kind: input, shape index: {}]
  %s8 = inlined_call_operand.hbm [shape: f32[32,32], index: 8, kind: input, shape index: {}]
  %s9 = inlined_call_operand.vmem [shape: f32[1,32], index: 9, kind: input, shape index: {}]
  %s10 = inlined_call_operand.vmem [shape: f32[64,32], index: 10, kind: output, shape index: {}]
  %s11 = sld [smem:[#allocation0]]
  $region62: #{res_normal_forward.1} parent=0
    _
  %s13 = ssub.s32 1, %s11
  %s14 = scalar_select 0, %s13, %s11
  $region1: #{res_normal_forward.1} parent=0
    #allocation2 [shape = 'u8[16384]{0}', space=vmem, size = 0x4000, scoped, tag = 'input window, operand 4, single buffered']
    #allocation3 [shape = 's32[1]{0}', space=sflag, size = 0x4, scoped, tag = 'scoped memory for res_normal_forward.1']
    #allocation4 [shape = 'u8[16384]{0}', space=vmem, size = 0x4000, scoped, tag = 'input window, operand 6, single buffered']
    #allocation5 [shape = 's32[1]{0}', space=sflag, size = 0x4, scoped, tag = 'scoped memory for res_normal_forward.1']
    #allocation6 [shape = 'u8[16384]{0}', space=vmem, size = 0x4000, scoped, tag = 'input window, operand 8, single buffered']
    %15 = vsyncpa [#allocation3], 0
    %16 = vsyncpa [#allocation5], 0
    // Predicated region
    $region2: #{res_normal_forward.1} parent=1 // pred_check
      _
    $region3: #{res_normal_forward.1} parent=1 // pred_check_branch
      %18 = sbr.rel (0) target = $region5
    $region4: #{res_normal_forward.1} parent=1 // pred_region
      _
    $region5: #{res_normal_forward.1} parent=1 // pred_fallthru
      _
    // Predicated region
    $region6: #{res_normal_forward.1} parent=1 // pred_check
      _
    $region7: #{res_normal_forward.1} parent=1 // pred_check_branch
      %20 = sbr.rel (0) target = $region9
    $region8: #{res_normal_forward.1} parent=1 // pred_region
      _
    $region9: #{res_normal_forward.1} parent=1 // pred_fallthru
      _
    // Predicated region
    $region10: #{res_normal_forward.1} parent=1 // pred_check
      _
    $region11: #{res_normal_forward.1} parent=1 // pred_check_branch
      %22 = sbr.rel (0) target = $region13
    $region12: #{res_normal_forward.1} parent=1 // pred_region
      _
    $region13: #{res_normal_forward.1} parent=1 // pred_fallthru
      _
    // Predicated region
    $region14: #{res_normal_forward.1} parent=1 // pred_check
      _
    $region15: #{res_normal_forward.1} parent=1 // pred_check_branch
      %24 = sbr.rel (0) target = $region17
    $region16: #{res_normal_forward.1} parent=1 // pred_region
      _
    $region17: #{res_normal_forward.1} parent=1 // pred_fallthru
      _
    // Predicated region
    $region18: #{res_normal_forward.1} parent=1 // pred_check
      _
    $region19: #{res_normal_forward.1} parent=1 // pred_check_branch
      %26 = sbr.rel (0) target = $region21
    $region20: #{res_normal_forward.1} parent=1 // pred_region
      %s28 = ssub.s32 512, 512
      %29 = vsyncadd [#allocation3], %s28
      %s30 = sshll.u32 [#allocation2], 4
      %s31 = int_to_ptr.vmem [resolvable:$true] %s30
      %36 = dma.hbm_to_vmem [thread:$0]  %s4, 512, %s31, [#allocation3], 128, 128, 8
    $region21: #{res_normal_forward.1} parent=1 // pred_fallthru
      _
    // Predicated region
    $region22: #{res_normal_forward.1} parent=1 // pred_check
      _
    $region23: #{res_normal_forward.1} parent=1 // pred_check_branch
      %38 = sbr.rel (0) target = $region25
    $region24: #{res_normal_forward.1} parent=1 // pred_region
      _
    $region25: #{res_normal_forward.1} parent=1 // pred_fallthru
      _
    // Predicated region
    $region26: #{res_normal_forward.1} parent=1 // pred_check
      _
    $region27: #{res_normal_forward.1} parent=1 // pred_check_branch
      %40 = sbr.rel (0) target = $region29
    $region28: #{res_normal_forward.1} parent=1 // pred_region
      %s42 = ssub.s32 512, 512
      %43 = vsyncadd [#allocation5], %s42
      %s44 = sshll.u32 [#allocation4], 4
      %s45 = int_to_ptr.vmem [resolvable:$true] %s44
      %50 = dma.hbm_to_vmem [thread:$0]  %s6, 512, %s45, [#allocation5], 128, 128, 8
    $region29: #{res_normal_forward.1} parent=1 // pred_fallthru
      _
    // Predicated region
    $region30: #{res_normal_forward.1} parent=1 // pred_check
      _
    $region31: #{res_normal_forward.1} parent=1 // pred_check_branch
      %52 = sbr.rel (0) target = $region33
    $region32: #{res_normal_forward.1} parent=1 // pred_region
      _
    $region33: #{res_normal_forward.1} parent=1 // pred_fallthru
      _
    // Predicated region
    $region34: #{res_normal_forward.1} parent=1 // pred_check
      _
    $region35: #{res_normal_forward.1} parent=1 // pred_check_branch
      %54 = sbr.rel (0) target = $region37
    $region36: #{res_normal_forward.1} parent=1 // pred_region
      %s56 = ssub.s32 512, 512
      %57 = vsyncadd [#allocation5], %s56
      %s58 = sshll.u32 [#allocation6], 4
      %s59 = int_to_ptr.vmem [resolvable:$true] %s58
      %64 = dma.hbm_to_vmem [thread:$0]  %s8, 512, %s59, [#allocation5], 128, 128, 8
    $region37: #{res_normal_forward.1} parent=1 // pred_fallthru
      _
    // Predicated region
    $region38: #{res_normal_forward.1} parent=1 // pred_check
      _
    $region39: #{res_normal_forward.1} parent=1 // pred_check_branch
      %66 = sbr.rel (0) target = $region41
    $region40: #{res_normal_forward.1} parent=1 // pred_region
      _
    $region41: #{res_normal_forward.1} parent=1 // pred_fallthru
      _
    // Predicated region
    $region42: #{res_normal_forward.1} parent=1 // pred_check
      _
    $region43: #{res_normal_forward.1} parent=1 // pred_check_branch
      %68 = sbr.rel (0) target = $region45
    $region44: #{res_normal_forward.1} parent=1 // pred_region
      %69 = dma.done [#allocation3], 512
    $region45: #{res_normal_forward.1} parent=1 // pred_fallthru
      _
    // Predicated region
    $region46: #{res_normal_forward.1} parent=1 // pred_check
      _
    $region47: #{res_normal_forward.1} parent=1 // pred_check_branch
      %71 = sbr.rel (0) target = $region49
    $region48: #{res_normal_forward.1} parent=1 // pred_region
      %72 = dma.done [#allocation5], 512
    $region49: #{res_normal_forward.1} parent=1 // pred_fallthru
      _
    // Predicated region
    $region50: #{res_normal_forward.1} parent=1 // pred_check
      _
    $region51: #{res_normal_forward.1} parent=1 // pred_check_branch
      %74 = sbr.rel (0) target = $region53
    $region52: #{res_normal_forward.1} parent=1 // pred_region
      %75 = dma.done [#allocation5], 512
    $region53: #{res_normal_forward.1} parent=1 // pred_fallthru
      _
    %v76 = vld [vmem:[%s0] sm:$0xff]
    %v77 = vld [vmem:[%s0 + $0x8] sm:$0xff]
    %v78 = vld [vmem:[%s0 + $0x10] sm:$0xff]
    %v79 = vld [vmem:[%s0 + $0x18] sm:$0xff]
    %v80 = vld [vmem:[%s0 + $0x20] sm:$0xff]
    %v81 = vld [vmem:[%s0 + $0x28] sm:$0xff]
    %v82 = vld [vmem:[%s0 + $0x30] sm:$0xff]
    %v83 = vld [vmem:[%s0 + $0x38] sm:$0xff]
    %v84 = vld [vmem:[%s1] sm:$0xff]
    %v85 = vld [vmem:[%s1 + $0x8] sm:$0xff]
    %v86 = vld [vmem:[%s1 + $0x10] sm:$0xff]
    %v87 = vld [vmem:[%s1 + $0x18] sm:$0xff]
    %v88 = vld [vmem:[%s1 + $0x20] sm:$0xff]
    %v89 = vld [vmem:[%s1 + $0x28] sm:$0xff]
    %v90 = vld [vmem:[%s1 + $0x30] sm:$0xff]
    %v91 = vld [vmem:[%s1 + $0x38] sm:$0xff]
    %v92 = vld [vmem:[%s2] sm:$0xff]
    %v93 = vld [vmem:[%s2 + $0x8] sm:$0xff]
    %v94 = vld [vmem:[%s2 + $0x10] sm:$0xff]
    %v95 = vld [vmem:[%s2 + $0x18] sm:$0xff]
    %vm96 = vcmask 261120
    %v98 = vsel %vm96, %v76, 0
    %v101 = vsel %vm96, %v77, 0
    %v104 = vsel %vm96, %v78, 0
    %v107 = vsel %vm96, %v79, 0
    %v110 = vsel %vm96, %v80, 0
    %v113 = vsel %vm96, %v81, 0
    %v116 = vsel %vm96, %v82, 0
    %v119 = vsel %vm96, %v83, 0
    %121 = vmatprep.subr.mxu0 0.0
    %122 = vmatpush1.msra.mxu0 0.0
    %123 = vmatprep.subr.mxu0 0.0
    %124 = vmatpush1.msra.mxu0 0.0
    %125 = vmatprep.subr.mxu0 0.0
    %126 = vmatpush1.msra.mxu0 0.0
    %127 = vmatprep.subr.mxu0 0.0
    %128 = vmatpush1.msra.mxu0 0.0
    %129 = vmatprep.subr.mxu0 0.0
    %130 = vmatpush1.msra.mxu0 0.0
    %131 = vmatprep.subr.mxu0 0.0
    %132 = vmatpush1.msra.mxu0 0.0
    %133 = vmatprep.subr.mxu0 0.0
    %134 = vmatpush1.msra.mxu0 0.0
    %135 = vmatprep.subr.mxu0 0.0
    %136 = vmatpush1.msra.mxu0 0.0
    %137 = vmatprep.subr.mxu0 0.0
    %138 = vmatpush1.msra.mxu0 0.0
    %139 = vmatprep.subr.mxu0 0.0
    %140 = vmatpush1.msra.mxu0 0.0
    %141 = vmatprep.subr.mxu0 0.0
    %142 = vmatpush1.msra.mxu0 0.0
    %143 = vmatprep.subr.mxu0 0.0
    %144 = vmatpush1.msra.mxu0 0.0
    %145 = vmatprep.subr.mxu0 0.0
    %146 = vmatpush1.msra.mxu0 %v95
    %147 = vmatprep.subr.mxu0 0.0
    %148 = vmatpush1.msra.mxu0 %v94
    %149 = vmatprep.subr.mxu0 0.0
    %150 = vmatpush1.msra.mxu0 %v93
    %151 = vmatprep.subr.mxu0 0.0
    %152 = vmatpush1.msra.mxu0 %v92
    %153 = vmatprep.subr.mxu0 0.0
    %154 = vmatpush2.msra.mxu0 0.0
    %155 = vmatprep.subr.mxu0 0.0
    %156 = vmatpush2.msra.mxu0 0.0
    %157 = vmatprep.subr.mxu0 0.0
    %158 = vmatpush2.msra.mxu0 0.0
    %159 = vmatprep.subr.mxu0 0.0
    %160 = vmatpush2.msra.mxu0 0.0
    %161 = vmatprep.subr.mxu0 0.0
    %162 = vmatpush2.msra.mxu0 0.0
    %163 = vmatprep.subr.mxu0 0.0
    %164 = vmatpush2.msra.mxu0 0.0
    %165 = vmatprep.subr.mxu0 0.0
    %166 = vmatpush2.msra.mxu0 0.0
    %167 = vmatprep.subr.mxu0 0.0
    %168 = vmatpush2.msra.mxu0 0.0
    %169 = vmatprep.subr.mxu0 0.0
    %170 = vmatpush2.msra.mxu0 0.0
    %171 = vmatprep.subr.mxu0 0.0
    %172 = vmatpush2.msra.mxu0 0.0
    %173 = vmatprep.subr.mxu0 0.0
    %174 = vmatpush2.msra.mxu0 0.0
    %175 = vmatprep.subr.mxu0 0.0
    %176 = vmatpush2.msra.mxu0 0.0
    %177 = vmatprep.subr.mxu0 0.0
    %178 = vmatpush2.msra.mxu0 0.0
    %179 = vmatprep.subr.mxu0 0.0
    %180 = vmatpush2.msra.mxu0 0.0
    %181 = vmatprep.subr.mxu0 0.0
    %182 = vmatpush2.msra.mxu0 0.0
    %183 = vmatprep.subr.mxu0 0.0
    %184 = vmatpush2.msra.mxu0 0.0
    %185 = vmatprep.mubr.f32.mxu0 0.0
    %186 = vmatmul.mubr.f32.gmra.mxu0 %v98
    %v187 = vpop.f32.mrf.mxu0
    %v188 = vadd.f32 0.0, %v187
    %v189 = vpop.f32.mrf.mxu0
    %190 = vmatprep.mubr.f32.mxu0 0.0
    %191 = vmatmul.mubr.f32.gmra.mxu0 %v101
    %v192 = vpop.f32.mrf.mxu0
    %v193 = vadd.f32 0.0, %v192
    %v194 = vpop.f32.mrf.mxu0
    %195 = vmatprep.mubr.f32.mxu0 0.0
    %196 = vmatmul.mubr.f32.gmra.mxu0 %v104
    %v197 = vpop.f32.mrf.mxu0
    %v198 = vadd.f32 0.0, %v197
    %v199 = vpop.f32.mrf.mxu0
    %200 = vmatprep.mubr.f32.mxu0 0.0
    %201 = vmatmul.mubr.f32.gmra.mxu0 %v107
    %v202 = vpop.f32.mrf.mxu0
    %v203 = vadd.f32 0.0, %v202
    %v204 = vpop.f32.mrf.mxu0
    %205 = vmatprep.mubr.f32.mxu0 0.0
    %206 = vmatmul.mubr.f32.gmra.mxu0 %v110
    %v207 = vpop.f32.mrf.mxu0
    %v208 = vadd.f32 0.0, %v207
    %v209 = vpop.f32.mrf.mxu0
    %210 = vmatprep.mubr.f32.mxu0 0.0
    %211 = vmatmul.mubr.f32.gmra.mxu0 %v113
    %v212 = vpop.f32.mrf.mxu0
    %v213 = vadd.f32 0.0, %v212
    %v214 = vpop.f32.mrf.mxu0
    %215 = vmatprep.mubr.f32.mxu0 0.0
    %216 = vmatmul.mubr.f32.gmra.mxu0 %v116
    %v217 = vpop.f32.mrf.mxu0
    %v218 = vadd.f32 0.0, %v217
    %v219 = vpop.f32.mrf.mxu0
    %220 = vmatprep.mubr.f32.mxu0 0.0
    %221 = vmatmul.mubr.f32.gmra.mxu0 %v119
    %v222 = vpop.f32.mrf.mxu0
    %v223 = vadd.f32 0.0, %v222
    %v224 = vpop.f32.mrf.mxu0
    %225 = vdwg.mxu0
    %v226 = vld [vmem:[%s3] sm:$0x1]
    %v228 = vlaneseq
    %v229 = vshrl.u32 %v228, 7
    %v230 = vsub.s32 0, %v229
    %v231 = vrot.slane %v226, %v230
    %vm233 = vcmask 523264
    %v235 = vsel %vm233, %v84, 0
    %v238 = vsel %vm233, %v85, 0
    %v241 = vsel %vm233, %v86, 0
    %v244 = vsel %vm233, %v87, 0
    %v247 = vsel %vm233, %v88, 0
    %v250 = vsel %vm233, %v89, 0
    %v253 = vsel %vm233, %v90, 0
    %v256 = vsel %vm233, %v91, 0
    %258 = vmatprep.subr.mxu0 0.0
    %259 = vmatpush1.msra.mxu0 0.0
    %260 = vmatprep.subr.mxu0 0.0
    %261 = vmatpush1.msra.mxu0 0.0
    %262 = vmatprep.subr.mxu0 0.0
    %263 = vmatpush1.msra.mxu0 0.0
    %264 = vmatprep.subr.mxu0 0.0
    %265 = vmatpush1.msra.mxu0 0.0
    %266 = vmatprep.subr.mxu0 0.0
    %267 = vmatpush1.msra.mxu0 0.0
    %268 = vmatprep.subr.mxu0 0.0
    %269 = vmatpush1.msra.mxu0 0.0
    %270 = vmatprep.subr.mxu0 0.0
    %271 = vmatpush1.msra.mxu0 0.0
    %272 = vmatprep.subr.mxu0 0.0
    %273 = vmatpush1.msra.mxu0 0.0
    %274 = vmatprep.subr.mxu0 0.0
    %275 = vmatpush1.msra.mxu0 %v223
    %276 = vmatprep.subr.mxu0 0.0
    %277 = vmatpush1.msra.mxu0 %v218
    %278 = vmatprep.subr.mxu0 0.0
    %279 = vmatpush1.msra.mxu0 %v213
    %280 = vmatprep.subr.mxu0 0.0
    %281 = vmatpush1.msra.mxu0 %v208
    %282 = vmatprep.subr.mxu0 0.0
    %283 = vmatpush1.msra.mxu0 %v203
    %284 = vmatprep.subr.mxu0 0.0
    %285 = vmatpush1.msra.mxu0 %v198
    %286 = vmatprep.subr.mxu0 0.0
    %287 = vmatpush1.msra.mxu0 %v193
    %288 = vmatprep.subr.mxu0 0.0
    %289 = vmatpush1.msra.mxu0 %v188
    %290 = vmatprep.subr.mxu0 0.0
    %291 = vmatpush2.msra.mxu0 0.0
    %292 = vmatprep.subr.mxu0 0.0
    %293 = vmatpush2.msra.mxu0 0.0
    %294 = vmatprep.subr.mxu0 0.0
    %295 = vmatpush2.msra.mxu0 0.0
    %296 = vmatprep.subr.mxu0 0.0
    %297 = vmatpush2.msra.mxu0 0.0
    %298 = vmatprep.subr.mxu0 0.0
    %299 = vmatpush2.msra.mxu0 0.0
    %300 = vmatprep.subr.mxu0 0.0
    %301 = vmatpush2.msra.mxu0 0.0
    %302 = vmatprep.subr.mxu0 0.0
    %303 = vmatpush2.msra.mxu0 0.0
    %304 = vmatprep.subr.mxu0 0.0
    %305 = vmatpush2.msra.mxu0 0.0
    %306 = vmatprep.subr.mxu0 0.0
    %307 = vmatpush2.msra.mxu0 0.0
    %308 = vmatprep.subr.mxu0 0.0
    %309 = vmatpush2.msra.mxu0 0.0
    %310 = vmatprep.subr.mxu0 0.0
    %311 = vmatpush2.msra.mxu0 0.0
    %312 = vmatprep.subr.mxu0 0.0
    %313 = vmatpush2.msra.mxu0 0.0
    %314 = vmatprep.subr.mxu0 0.0
    %315 = vmatpush2.msra.mxu0 0.0
    %316 = vmatprep.subr.mxu0 0.0
    %317 = vmatpush2.msra.mxu0 0.0
    %318 = vmatprep.subr.mxu0 0.0
    %319 = vmatpush2.msra.mxu0 0.0
    %320 = vmatprep.subr.mxu0 0.0
    %321 = vmatpush2.msra.mxu0 0.0
    %322 = vmatprep.mubr.f32.mxu0 0.0
    %323 = vmatmul.mubr.f32.gmra.mxu0 %v235
    %v324 = vpop.f32.mrf.mxu0
    %v325 = vadd.f32 %v231, %v324
    %v326 = vpop.f32.mrf.mxu0
    %327 = vmatprep.mubr.f32.mxu0 0.0
    %328 = vmatmul.mubr.f32.gmra.mxu0 %v238
    %v329 = vpop.f32.mrf.mxu0
    %v330 = vadd.f32 %v231, %v329
    %v331 = vpop.f32.mrf.mxu0
    %332 = vmatprep.mubr.f32.mxu0 0.0
    %333 = vmatmul.mubr.f32.gmra.mxu0 %v241
    %v334 = vpop.f32.mrf.mxu0
    %v335 = vadd.f32 %v231, %v334
    %v336 = vpop.f32.mrf.mxu0
    %337 = vmatprep.mubr.f32.mxu0 0.0
    %338 = vmatmul.mubr.f32.gmra.mxu0 %v244
    %v339 = vpop.f32.mrf.mxu0
    %v340 = vadd.f32 %v231, %v339
    %v341 = vpop.f32.mrf.mxu0
    %342 = vmatprep.mubr.f32.mxu0 0.0
    %343 = vmatmul.mubr.f32.gmra.mxu0 %v247
    %v344 = vpop.f32.mrf.mxu0
    %v345 = vadd.f32 %v231, %v344
    %v346 = vpop.f32.mrf.mxu0
    %347 = vmatprep.mubr.f32.mxu0 0.0
    %348 = vmatmul.mubr.f32.gmra.mxu0 %v250
    %v349 = vpop.f32.mrf.mxu0
    %v350 = vadd.f32 %v231, %v349
    %v351 = vpop.f32.mrf.mxu0
    %352 = vmatprep.mubr.f32.mxu0 0.0
    %353 = vmatmul.mubr.f32.gmra.mxu0 %v253
    %v354 = vpop.f32.mrf.mxu0
    %v355 = vadd.f32 %v231, %v354
    %v356 = vpop.f32.mrf.mxu0
    %357 = vmatprep.mubr.f32.mxu0 0.0
    %358 = vmatmul.mubr.f32.gmra.mxu0 %v256
    %v359 = vpop.f32.mrf.mxu0
    %v360 = vadd.f32 %v231, %v359
    %v361 = vpop.f32.mrf.mxu0
    %362 = vdwg.mxu0
    %v363 = vmax.f32 %v325, 0.0
    %v364 = vmax.f32 %v330, 0.0
    %v365 = vmax.f32 %v335, 0.0
    %v366 = vmax.f32 %v340, 0.0
    %v367 = vmax.f32 %v345, 0.0
    %v368 = vmax.f32 %v350, 0.0
    %v369 = vmax.f32 %v355, 0.0
    %v370 = vmax.f32 %v360, 0.0
    %v371 = vld [vmem:[#allocation2] sm:$0xff]
    %v372 = vld [vmem:[#allocation2 + $0x8] sm:$0xff]
    %v373 = vld [vmem:[#allocation2 + $0x10] sm:$0xff]
    %v374 = vld [vmem:[#allocation2 + $0x18] sm:$0xff]
    %v376 = vsel %vm96, %v363, 0
    %v379 = vsel %vm96, %v364, 0
    %v382 = vsel %vm96, %v365, 0
    %v385 = vsel %vm96, %v366, 0
    %v388 = vsel %vm96, %v367, 0
    %v391 = vsel %vm96, %v368, 0
    %v394 = vsel %vm96, %v369, 0
    %v397 = vsel %vm96, %v370, 0
    %399 = vmatprep.subr.mxu0 0.0
    %400 = vmatpush1.msra.mxu0 0.0
    %401 = vmatprep.subr.mxu0 0.0
    %402 = vmatpush1.msra.mxu0 0.0
    %403 = vmatprep.subr.mxu0 0.0
    %404 = vmatpush1.msra.mxu0 0.0
    %405 = vmatprep.subr.mxu0 0.0
    %406 = vmatpush1.msra.mxu0 0.0
    %407 = vmatprep.subr.mxu0 0.0
    %408 = vmatpush1.msra.mxu0 0.0
    %409 = vmatprep.subr.mxu0 0.0
    %410 = vmatpush1.msra.mxu0 0.0
    %411 = vmatprep.subr.mxu0 0.0
    %412 = vmatpush1.msra.mxu0 0.0
    %413 = vmatprep.subr.mxu0 0.0
    %414 = vmatpush1.msra.mxu0 0.0
    %415 = vmatprep.subr.mxu0 0.0
    %416 = vmatpush1.msra.mxu0 0.0
    %417 = vmatprep.subr.mxu0 0.0
    %418 = vmatpush1.msra.mxu0 0.0
    %419 = vmatprep.subr.mxu0 0.0
    %420 = vmatpush1.msra.mxu0 0.0
    %421 = vmatprep.subr.mxu0 0.0
    %422 = vmatpush1.msra.mxu0 0.0
    %423 = vmatprep.subr.mxu0 0.0
    %424 = vmatpush1.msra.mxu0 %v374
    %425 = vmatprep.subr.mxu0 0.0
    %426 = vmatpush1.msra.mxu0 %v373
    %427 = vmatprep.subr.mxu0 0.0
    %428 = vmatpush1.msra.mxu0 %v372
    %429 = vmatprep.subr.mxu0 0.0
    %430 = vmatpush1.msra.mxu0 %v371
    %431 = vmatprep.subr.mxu0 0.0
    %432 = vmatpush2.msra.mxu0 0.0
    %433 = vmatprep.subr.mxu0 0.0
    %434 = vmatpush2.msra.mxu0 0.0
    %435 = vmatprep.subr.mxu0 0.0
    %436 = vmatpush2.msra.mxu0 0.0
    %437 = vmatprep.subr.mxu0 0.0
    %438 = vmatpush2.msra.mxu0 0.0
    %439 = vmatprep.subr.mxu0 0.0
    %440 = vmatpush2.msra.mxu0 0.0
    %441 = vmatprep.subr.mxu0 0.0
    %442 = vmatpush2.msra.mxu0 0.0
    %443 = vmatprep.subr.mxu0 0.0
    %444 = vmatpush2.msra.mxu0 0.0
    %445 = vmatprep.subr.mxu0 0.0
    %446 = vmatpush2.msra.mxu0 0.0
    %447 = vmatprep.subr.mxu0 0.0
    %448 = vmatpush2.msra.mxu0 0.0
    %449 = vmatprep.subr.mxu0 0.0
    %450 = vmatpush2.msra.mxu0 0.0
    %451 = vmatprep.subr.mxu0 0.0
    %452 = vmatpush2.msra.mxu0 0.0
    %453 = vmatprep.subr.mxu0 0.0
    %454 = vmatpush2.msra.mxu0 0.0
    %455 = vmatprep.subr.mxu0 0.0
    %456 = vmatpush2.msra.mxu0 0.0
    %457 = vmatprep.subr.mxu0 0.0
    %458 = vmatpush2.msra.mxu0 0.0
    %459 = vmatprep.subr.mxu0 0.0
    %460 = vmatpush2.msra.mxu0 0.0
    %461 = vmatprep.subr.mxu0 0.0
    %462 = vmatpush2.msra.mxu0 0.0
    %463 = vmatprep.mubr.f32.mxu0 0.0
    %464 = vmatmul.mubr.f32.gmra.mxu0 %v376
    %v465 = vpop.f32.mrf.mxu0
    %v466 = vadd.f32 0.0, %v465
    %v467 = vpop.f32.mrf.mxu0
    %468 = vmatprep.mubr.f32.mxu0 0.0
    %469 = vmatmul.mubr.f32.gmra.mxu0 %v379
    %v470 = vpop.f32.mrf.mxu0
    %v471 = vadd.f32 0.0, %v470
    %v472 = vpop.f32.mrf.mxu0
    %473 = vmatprep.mubr.f32.mxu0 0.0
    %474 = vmatmul.mubr.f32.gmra.mxu0 %v382
    %v475 = vpop.f32.mrf.mxu0
    %v476 = vadd.f32 0.0, %v475
    %v477 = vpop.f32.mrf.mxu0
    %478 = vmatprep.mubr.f32.mxu0 0.0
    %479 = vmatmul.mubr.f32.gmra.mxu0 %v385
    %v480 = vpop.f32.mrf.mxu0
    %v481 = vadd.f32 0.0, %v480
    %v482 = vpop.f32.mrf.mxu0
    %483 = vmatprep.mubr.f32.mxu0 0.0
    %484 = vmatmul.mubr.f32.gmra.mxu0 %v388
    %v485 = vpop.f32.mrf.mxu0
    %v486 = vadd.f32 0.0, %v485
    %v487 = vpop.f32.mrf.mxu0
    %488 = vmatprep.mubr.f32.mxu0 0.0
    %489 = vmatmul.mubr.f32.gmra.mxu0 %v391
    %v490 = vpop.f32.mrf.mxu0
    %v491 = vadd.f32 0.0, %v490
    %v492 = vpop.f32.mrf.mxu0
    %493 = vmatprep.mubr.f32.mxu0 0.0
    %494 = vmatmul.mubr.f32.gmra.mxu0 %v394
    %v495 = vpop.f32.mrf.mxu0
    %v496 = vadd.f32 0.0, %v495
    %v497 = vpop.f32.mrf.mxu0
    %498 = vmatprep.mubr.f32.mxu0 0.0
    %499 = vmatmul.mubr.f32.gmra.mxu0 %v397
    %v500 = vpop.f32.mrf.mxu0
    %v501 = vadd.f32 0.0, %v500
    %v502 = vpop.f32.mrf.mxu0
    %503 = vdwg.mxu0
    %v504 = vld [vmem:[%s5] sm:$0x1]
    %v506 = vlaneseq
    %v507 = vshrl.u32 %v506, 7
    %v508 = vsub.s32 0, %v507
    %v509 = vrot.slane %v504, %v508
    %511 = vmatprep.subr.mxu0 0.0
    %512 = vmatpush1.msra.mxu0 0.0
    %513 = vmatprep.subr.mxu0 0.0
    %514 = vmatpush1.msra.mxu0 0.0
    %515 = vmatprep.subr.mxu0 0.0
    %516 = vmatpush1.msra.mxu0 0.0
    %517 = vmatprep.subr.mxu0 0.0
    %518 = vmatpush1.msra.mxu0 0.0
    %519 = vmatprep.subr.mxu0 0.0
    %520 = vmatpush1.msra.mxu0 0.0
    %521 = vmatprep.subr.mxu0 0.0
    %522 = vmatpush1.msra.mxu0 0.0
    %523 = vmatprep.subr.mxu0 0.0
    %524 = vmatpush1.msra.mxu0 0.0
    %525 = vmatprep.subr.mxu0 0.0
    %526 = vmatpush1.msra.mxu0 0.0
    %527 = vmatprep.subr.mxu0 0.0
    %528 = vmatpush1.msra.mxu0 %v501
    %529 = vmatprep.subr.mxu0 0.0
    %530 = vmatpush1.msra.mxu0 %v496
    %531 = vmatprep.subr.mxu0 0.0
    %532 = vmatpush1.msra.mxu0 %v491
    %533 = vmatprep.subr.mxu0 0.0
    %534 = vmatpush1.msra.mxu0 %v486
    %535 = vmatprep.subr.mxu0 0.0
    %536 = vmatpush1.msra.mxu0 %v481
    %537 = vmatprep.subr.mxu0 0.0
    %538 = vmatpush1.msra.mxu0 %v476
    %539 = vmatprep.subr.mxu0 0.0
    %540 = vmatpush1.msra.mxu0 %v471
    %541 = vmatprep.subr.mxu0 0.0
    %542 = vmatpush1.msra.mxu0 %v466
    %543 = vmatprep.subr.mxu0 0.0
    %544 = vmatpush2.msra.mxu0 0.0
    %545 = vmatprep.subr.mxu0 0.0
    %546 = vmatpush2.msra.mxu0 0.0
    %547 = vmatprep.subr.mxu0 0.0
    %548 = vmatpush2.msra.mxu0 0.0
    %549 = vmatprep.subr.mxu0 0.0
    %550 = vmatpush2.msra.mxu0 0.0
    %551 = vmatprep.subr.mxu0 0.0
    %552 = vmatpush2.msra.mxu0 0.0
    %553 = vmatprep.subr.mxu0 0.0
    %554 = vmatpush2.msra.mxu0 0.0
    %555 = vmatprep.subr.mxu0 0.0
    %556 = vmatpush2.msra.mxu0 0.0
    %557 = vmatprep.subr.mxu0 0.0
    %558 = vmatpush2.msra.mxu0 0.0
    %559 = vmatprep.subr.mxu0 0.0
    %560 = vmatpush2.msra.mxu0 0.0
    %561 = vmatprep.subr.mxu0 0.0
    %562 = vmatpush2.msra.mxu0 0.0
    %563 = vmatprep.subr.mxu0 0.0
    %564 = vmatpush2.msra.mxu0 0.0
    %565 = vmatprep.subr.mxu0 0.0
    %566 = vmatpush2.msra.mxu0 0.0
    %567 = vmatprep.subr.mxu0 0.0
    %568 = vmatpush2.msra.mxu0 0.0
    %569 = vmatprep.subr.mxu0 0.0
    %570 = vmatpush2.msra.mxu0 0.0
    %571 = vmatprep.subr.mxu0 0.0
    %572 = vmatpush2.msra.mxu0 0.0
    %573 = vmatprep.subr.mxu0 0.0
    %574 = vmatpush2.msra.mxu0 0.0
    %575 = vmatprep.mubr.f32.mxu0 0.0
    %576 = vmatmul.mubr.f32.gmra.mxu0 %v235
    %v577 = vpop.f32.mrf.mxu0
    %v578 = vadd.f32 %v509, %v577
    %v579 = vpop.f32.mrf.mxu0
    %580 = vmatprep.mubr.f32.mxu0 0.0
    %581 = vmatmul.mubr.f32.gmra.mxu0 %v238
    %v582 = vpop.f32.mrf.mxu0
    %v583 = vadd.f32 %v509, %v582
    %v584 = vpop.f32.mrf.mxu0
    %585 = vmatprep.mubr.f32.mxu0 0.0
    %586 = vmatmul.mubr.f32.gmra.mxu0 %v241
    %v587 = vpop.f32.mrf.mxu0
    %v588 = vadd.f32 %v509, %v587
    %v589 = vpop.f32.mrf.mxu0
    %590 = vmatprep.mubr.f32.mxu0 0.0
    %591 = vmatmul.mubr.f32.gmra.mxu0 %v244
    %v592 = vpop.f32.mrf.mxu0
    %v593 = vadd.f32 %v509, %v592
    %v594 = vpop.f32.mrf.mxu0
    %595 = vmatprep.mubr.f32.mxu0 0.0
    %596 = vmatmul.mubr.f32.gmra.mxu0 %v247
    %v597 = vpop.f32.mrf.mxu0
    %v598 = vadd.f32 %v509, %v597
    %v599 = vpop.f32.mrf.mxu0
    %600 = vmatprep.mubr.f32.mxu0 0.0
    %601 = vmatmul.mubr.f32.gmra.mxu0 %v250
    %v602 = vpop.f32.mrf.mxu0
    %v603 = vadd.f32 %v509, %v602
    %v604 = vpop.f32.mrf.mxu0
    %605 = vmatprep.mubr.f32.mxu0 0.0
    %606 = vmatmul.mubr.f32.gmra.mxu0 %v253
    %v607 = vpop.f32.mrf.mxu0
    %v608 = vadd.f32 %v509, %v607
    %v609 = vpop.f32.mrf.mxu0
    %610 = vmatprep.mubr.f32.mxu0 0.0
    %611 = vmatmul.mubr.f32.gmra.mxu0 %v256
    %v612 = vpop.f32.mrf.mxu0
    %v613 = vadd.f32 %v509, %v612
    %v614 = vpop.f32.mrf.mxu0
    %615 = vdwg.mxu0
    %v616 = vld [vmem:[#allocation4] sm:$0xff]
    %v617 = vld [vmem:[#allocation4 + $0x8] sm:$0xff]
    %v618 = vld [vmem:[#allocation4 + $0x10] sm:$0xff]
    %v619 = vld [vmem:[#allocation4 + $0x18] sm:$0xff]
    %v621 = vsel %vm96, %v578, 0
    %v624 = vsel %vm96, %v583, 0
    %v627 = vsel %vm96, %v588, 0
    %v630 = vsel %vm96, %v593, 0
    %v633 = vsel %vm96, %v598, 0
    %v636 = vsel %vm96, %v603, 0
    %v639 = vsel %vm96, %v608, 0
    %v642 = vsel %vm96, %v613, 0
    %644 = vmatprep.subr.mxu0 0.0
    %645 = vmatpush1.msra.mxu0 0.0
    %646 = vmatprep.subr.mxu0 0.0
    %647 = vmatpush1.msra.mxu0 0.0
    %648 = vmatprep.subr.mxu0 0.0
    %649 = vmatpush1.msra.mxu0 0.0
    %650 = vmatprep.subr.mxu0 0.0
    %651 = vmatpush1.msra.mxu0 0.0
    %652 = vmatprep.subr.mxu0 0.0
    %653 = vmatpush1.msra.mxu0 0.0
    %654 = vmatprep.subr.mxu0 0.0
    %655 = vmatpush1.msra.mxu0 0.0
    %656 = vmatprep.subr.mxu0 0.0
    %657 = vmatpush1.msra.mxu0 0.0
    %658 = vmatprep.subr.mxu0 0.0
    %659 = vmatpush1.msra.mxu0 0.0
    %660 = vmatprep.subr.mxu0 0.0
    %661 = vmatpush1.msra.mxu0 0.0
    %662 = vmatprep.subr.mxu0 0.0
    %663 = vmatpush1.msra.mxu0 0.0
    %664 = vmatprep.subr.mxu0 0.0
    %665 = vmatpush1.msra.mxu0 0.0
    %666 = vmatprep.subr.mxu0 0.0
    %667 = vmatpush1.msra.mxu0 0.0
    %668 = vmatprep.subr.mxu0 0.0
    %669 = vmatpush1.msra.mxu0 %v619
    %670 = vmatprep.subr.mxu0 0.0
    %671 = vmatpush1.msra.mxu0 %v618
    %672 = vmatprep.subr.mxu0 0.0
    %673 = vmatpush1.msra.mxu0 %v617
    %674 = vmatprep.subr.mxu0 0.0
    %675 = vmatpush1.msra.mxu0 %v616
    %676 = vmatprep.subr.mxu0 0.0
    %677 = vmatpush2.msra.mxu0 0.0
    %678 = vmatprep.subr.mxu0 0.0
    %679 = vmatpush2.msra.mxu0 0.0
    %680 = vmatprep.subr.mxu0 0.0
    %681 = vmatpush2.msra.mxu0 0.0
    %682 = vmatprep.subr.mxu0 0.0
    %683 = vmatpush2.msra.mxu0 0.0
    %684 = vmatprep.subr.mxu0 0.0
    %685 = vmatpush2.msra.mxu0 0.0
    %686 = vmatprep.subr.mxu0 0.0
    %687 = vmatpush2.msra.mxu0 0.0
    %688 = vmatprep.subr.mxu0 0.0
    %689 = vmatpush2.msra.mxu0 0.0
    %690 = vmatprep.subr.mxu0 0.0
    %691 = vmatpush2.msra.mxu0 0.0
    %692 = vmatprep.subr.mxu0 0.0
    %693 = vmatpush2.msra.mxu0 0.0
    %694 = vmatprep.subr.mxu0 0.0
    %695 = vmatpush2.msra.mxu0 0.0
    %696 = vmatprep.subr.mxu0 0.0
    %697 = vmatpush2.msra.mxu0 0.0
    %698 = vmatprep.subr.mxu0 0.0
    %699 = vmatpush2.msra.mxu0 0.0
    %700 = vmatprep.subr.mxu0 0.0
    %701 = vmatpush2.msra.mxu0 0.0
    %702 = vmatprep.subr.mxu0 0.0
    %703 = vmatpush2.msra.mxu0 0.0
    %704 = vmatprep.subr.mxu0 0.0
    %705 = vmatpush2.msra.mxu0 0.0
    %706 = vmatprep.subr.mxu0 0.0
    %707 = vmatpush2.msra.mxu0 0.0
    %708 = vmatprep.mubr.f32.mxu0 0.0
    %709 = vmatmul.mubr.f32.gmra.mxu0 %v621
    %v710 = vpop.f32.mrf.mxu0
    %v711 = vadd.f32 0.0, %v710
    %v712 = vpop.f32.mrf.mxu0
    %713 = vmatprep.mubr.f32.mxu0 0.0
    %714 = vmatmul.mubr.f32.gmra.mxu0 %v624
    %v715 = vpop.f32.mrf.mxu0
    %v716 = vadd.f32 0.0, %v715
    %v717 = vpop.f32.mrf.mxu0
    %718 = vmatprep.mubr.f32.mxu0 0.0
    %719 = vmatmul.mubr.f32.gmra.mxu0 %v627
    %v720 = vpop.f32.mrf.mxu0
    %v721 = vadd.f32 0.0, %v720
    %v722 = vpop.f32.mrf.mxu0
    %723 = vmatprep.mubr.f32.mxu0 0.0
    %724 = vmatmul.mubr.f32.gmra.mxu0 %v630
    %v725 = vpop.f32.mrf.mxu0
    %v726 = vadd.f32 0.0, %v725
    %v727 = vpop.f32.mrf.mxu0
    %728 = vmatprep.mubr.f32.mxu0 0.0
    %729 = vmatmul.mubr.f32.gmra.mxu0 %v633
    %v730 = vpop.f32.mrf.mxu0
    %v731 = vadd.f32 0.0, %v730
    %v732 = vpop.f32.mrf.mxu0
    %733 = vmatprep.mubr.f32.mxu0 0.0
    %734 = vmatmul.mubr.f32.gmra.mxu0 %v636
    %v735 = vpop.f32.mrf.mxu0
    %v736 = vadd.f32 0.0, %v735
    %v737 = vpop.f32.mrf.mxu0
    %738 = vmatprep.mubr.f32.mxu0 0.0
    %739 = vmatmul.mubr.f32.gmra.mxu0 %v639
    %v740 = vpop.f32.mrf.mxu0
    %v741 = vadd.f32 0.0, %v740
    %v742 = vpop.f32.mrf.mxu0
    %743 = vmatprep.mubr.f32.mxu0 0.0
    %744 = vmatmul.mubr.f32.gmra.mxu0 %v642
    %v745 = vpop.f32.mrf.mxu0
    %v746 = vadd.f32 0.0, %v745
    %v747 = vpop.f32.mrf.mxu0
    %748 = vdwg.mxu0
    %v749 = vld [vmem:[%s7] sm:$0x1]
    %v751 = vlaneseq
    %v752 = vshrl.u32 %v751, 7
    %v753 = vsub.s32 0, %v752
    %v754 = vrot.slane %v749, %v753
    %756 = vmatprep.subr.mxu0 0.0
    %757 = vmatpush1.msra.mxu0 0.0
    %758 = vmatprep.subr.mxu0 0.0
    %759 = vmatpush1.msra.mxu0 0.0
    %760 = vmatprep.subr.mxu0 0.0
    %761 = vmatpush1.msra.mxu0 0.0
    %762 = vmatprep.subr.mxu0 0.0
    %763 = vmatpush1.msra.mxu0 0.0
    %764 = vmatprep.subr.mxu0 0.0
    %765 = vmatpush1.msra.mxu0 0.0
    %766 = vmatprep.subr.mxu0 0.0
    %767 = vmatpush1.msra.mxu0 0.0
    %768 = vmatprep.subr.mxu0 0.0
    %769 = vmatpush1.msra.mxu0 0.0
    %770 = vmatprep.subr.mxu0 0.0
    %771 = vmatpush1.msra.mxu0 0.0
    %772 = vmatprep.subr.mxu0 0.0
    %773 = vmatpush1.msra.mxu0 %v746
    %774 = vmatprep.subr.mxu0 0.0
    %775 = vmatpush1.msra.mxu0 %v741
    %776 = vmatprep.subr.mxu0 0.0
    %777 = vmatpush1.msra.mxu0 %v736
    %778 = vmatprep.subr.mxu0 0.0
    %779 = vmatpush1.msra.mxu0 %v731
    %780 = vmatprep.subr.mxu0 0.0
    %781 = vmatpush1.msra.mxu0 %v726
    %782 = vmatprep.subr.mxu0 0.0
    %783 = vmatpush1.msra.mxu0 %v721
    %784 = vmatprep.subr.mxu0 0.0
    %785 = vmatpush1.msra.mxu0 %v716
    %786 = vmatprep.subr.mxu0 0.0
    %787 = vmatpush1.msra.mxu0 %v711
    %788 = vmatprep.subr.mxu0 0.0
    %789 = vmatpush2.msra.mxu0 0.0
    %790 = vmatprep.subr.mxu0 0.0
    %791 = vmatpush2.msra.mxu0 0.0
    %792 = vmatprep.subr.mxu0 0.0
    %793 = vmatpush2.msra.mxu0 0.0
    %794 = vmatprep.subr.mxu0 0.0
    %795 = vmatpush2.msra.mxu0 0.0
    %796 = vmatprep.subr.mxu0 0.0
    %797 = vmatpush2.msra.mxu0 0.0
    %798 = vmatprep.subr.mxu0 0.0
    %799 = vmatpush2.msra.mxu0 0.0
    %800 = vmatprep.subr.mxu0 0.0
    %801 = vmatpush2.msra.mxu0 0.0
    %802 = vmatprep.subr.mxu0 0.0
    %803 = vmatpush2.msra.mxu0 0.0
    %804 = vmatprep.subr.mxu0 0.0
    %805 = vmatpush2.msra.mxu0 0.0
    %806 = vmatprep.subr.mxu0 0.0
    %807 = vmatpush2.msra.mxu0 0.0
    %808 = vmatprep.subr.mxu0 0.0
    %809 = vmatpush2.msra.mxu0 0.0
    %810 = vmatprep.subr.mxu0 0.0
    %811 = vmatpush2.msra.mxu0 0.0
    %812 = vmatprep.subr.mxu0 0.0
    %813 = vmatpush2.msra.mxu0 0.0
    %814 = vmatprep.subr.mxu0 0.0
    %815 = vmatpush2.msra.mxu0 0.0
    %816 = vmatprep.subr.mxu0 0.0
    %817 = vmatpush2.msra.mxu0 0.0
    %818 = vmatprep.subr.mxu0 0.0
    %819 = vmatpush2.msra.mxu0 0.0
    %820 = vmatprep.mubr.f32.mxu0 0.0
    %821 = vmatmul.mubr.f32.gmra.mxu0 %v235
    %v822 = vpop.f32.mrf.mxu0
    %v823 = vadd.f32 %v754, %v822
    %v824 = vpop.f32.mrf.mxu0
    %825 = vmatprep.mubr.f32.mxu0 0.0
    %826 = vmatmul.mubr.f32.gmra.mxu0 %v238
    %v827 = vpop.f32.mrf.mxu0
    %v828 = vadd.f32 %v754, %v827
    %v829 = vpop.f32.mrf.mxu0
    %830 = vmatprep.mubr.f32.mxu0 0.0
    %831 = vmatmul.mubr.f32.gmra.mxu0 %v241
    %v832 = vpop.f32.mrf.mxu0
    %v833 = vadd.f32 %v754, %v832
    %v834 = vpop.f32.mrf.mxu0
    %835 = vmatprep.mubr.f32.mxu0 0.0
    %836 = vmatmul.mubr.f32.gmra.mxu0 %v244
    %v837 = vpop.f32.mrf.mxu0
    %v838 = vadd.f32 %v754, %v837
    %v839 = vpop.f32.mrf.mxu0
    %840 = vmatprep.mubr.f32.mxu0 0.0
    %841 = vmatmul.mubr.f32.gmra.mxu0 %v247
    %v842 = vpop.f32.mrf.mxu0
    %v843 = vadd.f32 %v754, %v842
    %v844 = vpop.f32.mrf.mxu0
    %845 = vmatprep.mubr.f32.mxu0 0.0
    %846 = vmatmul.mubr.f32.gmra.mxu0 %v250
    %v847 = vpop.f32.mrf.mxu0
    %v848 = vadd.f32 %v754, %v847
    %v849 = vpop.f32.mrf.mxu0
    %850 = vmatprep.mubr.f32.mxu0 0.0
    %851 = vmatmul.mubr.f32.gmra.mxu0 %v253
    %v852 = vpop.f32.mrf.mxu0
    %v853 = vadd.f32 %v754, %v852
    %v854 = vpop.f32.mrf.mxu0
    %855 = vmatprep.mubr.f32.mxu0 0.0
    %856 = vmatmul.mubr.f32.gmra.mxu0 %v256
    %v857 = vpop.f32.mrf.mxu0
    %v858 = vadd.f32 %v754, %v857
    %v859 = vpop.f32.mrf.mxu0
    %860 = vdwg.mxu0
    %v861 = vmax.f32 %v823, 0.0
    %v862 = vmax.f32 %v828, 0.0
    %v863 = vmax.f32 %v833, 0.0
    %v864 = vmax.f32 %v838, 0.0
    %v865 = vmax.f32 %v843, 0.0
    %v866 = vmax.f32 %v848, 0.0
    %v867 = vmax.f32 %v853, 0.0
    %v868 = vmax.f32 %v858, 0.0
    %v869 = vld [vmem:[#allocation6] sm:$0xff]
    %v870 = vld [vmem:[#allocation6 + $0x8] sm:$0xff]
    %v871 = vld [vmem:[#allocation6 + $0x10] sm:$0xff]
    %v872 = vld [vmem:[#allocation6 + $0x18] sm:$0xff]
    %v874 = vsel %vm96, %v861, 0
    %v877 = vsel %vm96, %v862, 0
    %v880 = vsel %vm96, %v863, 0
    %v883 = vsel %vm96, %v864, 0
    %v886 = vsel %vm96, %v865, 0
    %v889 = vsel %vm96, %v866, 0
    %v892 = vsel %vm96, %v867, 0
    %v895 = vsel %vm96, %v868, 0
    %897 = vmatprep.subr.mxu0 0.0
    %898 = vmatpush1.msra.mxu0 0.0
    %899 = vmatprep.subr.mxu0 0.0
    %900 = vmatpush1.msra.mxu0 0.0
    %901 = vmatprep.subr.mxu0 0.0
    %902 = vmatpush1.msra.mxu0 0.0
    %903 = vmatprep.subr.mxu0 0.0
    %904 = vmatpush1.msra.mxu0 0.0
    %905 = vmatprep.subr.mxu0 0.0
    %906 = vmatpush1.msra.mxu0 0.0
    %907 = vmatprep.subr.mxu0 0.0
    %908 = vmatpush1.msra.mxu0 0.0
    %909 = vmatprep.subr.mxu0 0.0
    %910 = vmatpush1.msra.mxu0 0.0
    %911 = vmatprep.subr.mxu0 0.0
    %912 = vmatpush1.msra.mxu0 0.0
    %913 = vmatprep.subr.mxu0 0.0
    %914 = vmatpush1.msra.mxu0 0.0
    %915 = vmatprep.subr.mxu0 0.0
    %916 = vmatpush1.msra.mxu0 0.0
    %917 = vmatprep.subr.mxu0 0.0
    %918 = vmatpush1.msra.mxu0 0.0
    %919 = vmatprep.subr.mxu0 0.0
    %920 = vmatpush1.msra.mxu0 0.0
    %921 = vmatprep.subr.mxu0 0.0
    %922 = vmatpush1.msra.mxu0 %v872
    %923 = vmatprep.subr.mxu0 0.0
    %924 = vmatpush1.msra.mxu0 %v871
    %925 = vmatprep.subr.mxu0 0.0
    %926 = vmatpush1.msra.mxu0 %v870
    %927 = vmatprep.subr.mxu0 0.0
    %928 = vmatpush1.msra.mxu0 %v869
    %929 = vmatprep.subr.mxu0 0.0
    %930 = vmatpush2.msra.mxu0 0.0
    %931 = vmatprep.subr.mxu0 0.0
    %932 = vmatpush2.msra.mxu0 0.0
    %933 = vmatprep.subr.mxu0 0.0
    %934 = vmatpush2.msra.mxu0 0.0
    %935 = vmatprep.subr.mxu0 0.0
    %936 = vmatpush2.msra.mxu0 0.0
    %937 = vmatprep.subr.mxu0 0.0
    %938 = vmatpush2.msra.mxu0 0.0
    %939 = vmatprep.subr.mxu0 0.0
    %940 = vmatpush2.msra.mxu0 0.0
    %941 = vmatprep.subr.mxu0 0.0
    %942 = vmatpush2.msra.mxu0 0.0
    %943 = vmatprep.subr.mxu0 0.0
    %944 = vmatpush2.msra.mxu0 0.0
    %945 = vmatprep.subr.mxu0 0.0
    %946 = vmatpush2.msra.mxu0 0.0
    %947 = vmatprep.subr.mxu0 0.0
    %948 = vmatpush2.msra.mxu0 0.0
    %949 = vmatprep.subr.mxu0 0.0
    %950 = vmatpush2.msra.mxu0 0.0
    %951 = vmatprep.subr.mxu0 0.0
    %952 = vmatpush2.msra.mxu0 0.0
    %953 = vmatprep.subr.mxu0 0.0
    %954 = vmatpush2.msra.mxu0 0.0
    %955 = vmatprep.subr.mxu0 0.0
    %956 = vmatpush2.msra.mxu0 0.0
    %957 = vmatprep.subr.mxu0 0.0
    %958 = vmatpush2.msra.mxu0 0.0
    %959 = vmatprep.subr.mxu0 0.0
    %960 = vmatpush2.msra.mxu0 0.0
    %961 = vmatprep.mubr.f32.mxu0 0.0
    %962 = vmatmul.mubr.f32.gmra.mxu0 %v874
    %v963 = vpop.f32.mrf.mxu0
    %v964 = vadd.f32 0.0, %v963
    %v965 = vpop.f32.mrf.mxu0
    %966 = vmatprep.mubr.f32.mxu0 0.0
    %967 = vmatmul.mubr.f32.gmra.mxu0 %v877
    %v968 = vpop.f32.mrf.mxu0
    %v969 = vadd.f32 0.0, %v968
    %v970 = vpop.f32.mrf.mxu0
    %971 = vmatprep.mubr.f32.mxu0 0.0
    %972 = vmatmul.mubr.f32.gmra.mxu0 %v880
    %v973 = vpop.f32.mrf.mxu0
    %v974 = vadd.f32 0.0, %v973
    %v975 = vpop.f32.mrf.mxu0
    %976 = vmatprep.mubr.f32.mxu0 0.0
    %977 = vmatmul.mubr.f32.gmra.mxu0 %v883
    %v978 = vpop.f32.mrf.mxu0
    %v979 = vadd.f32 0.0, %v978
    %v980 = vpop.f32.mrf.mxu0
    %981 = vmatprep.mubr.f32.mxu0 0.0
    %982 = vmatmul.mubr.f32.gmra.mxu0 %v886
    %v983 = vpop.f32.mrf.mxu0
    %v984 = vadd.f32 0.0, %v983
    %v985 = vpop.f32.mrf.mxu0
    %986 = vmatprep.mubr.f32.mxu0 0.0
    %987 = vmatmul.mubr.f32.gmra.mxu0 %v889
    %v988 = vpop.f32.mrf.mxu0
    %v989 = vadd.f32 0.0, %v988
    %v990 = vpop.f32.mrf.mxu0
    %991 = vmatprep.mubr.f32.mxu0 0.0
    %992 = vmatmul.mubr.f32.gmra.mxu0 %v892
    %v993 = vpop.f32.mrf.mxu0
    %v994 = vadd.f32 0.0, %v993
    %v995 = vpop.f32.mrf.mxu0
    %996 = vmatprep.mubr.f32.mxu0 0.0
    %997 = vmatmul.mubr.f32.gmra.mxu0 %v895
    %v998 = vpop.f32.mrf.mxu0
    %v999 = vadd.f32 0.0, %v998
    %v1000 = vpop.f32.mrf.mxu0
    %1001 = vdwg.mxu0
    %v1002 = vld [vmem:[%s9] sm:$0x1]
    %v1004 = vlaneseq
    %v1005 = vshrl.u32 %v1004, 7
    %v1006 = vsub.s32 0, %v1005
    %v1007 = vrot.slane %v1002, %v1006
    %1009 = vmatprep.subr.mxu0 0.0
    %1010 = vmatpush1.msra.mxu0 0.0
    %1011 = vmatprep.subr.mxu0 0.0
    %1012 = vmatpush1.msra.mxu0 0.0
    %1013 = vmatprep.subr.mxu0 0.0
    %1014 = vmatpush1.msra.mxu0 0.0
    %1015 = vmatprep.subr.mxu0 0.0
    %1016 = vmatpush1.msra.mxu0 0.0
    %1017 = vmatprep.subr.mxu0 0.0
    %1018 = vmatpush1.msra.mxu0 0.0
    %1019 = vmatprep.subr.mxu0 0.0
    %1020 = vmatpush1.msra.mxu0 0.0
    %1021 = vmatprep.subr.mxu0 0.0
    %1022 = vmatpush1.msra.mxu0 0.0
    %1023 = vmatprep.subr.mxu0 0.0
    %1024 = vmatpush1.msra.mxu0 0.0
    %1025 = vmatprep.subr.mxu0 0.0
    %1026 = vmatpush1.msra.mxu0 %v999
    %1027 = vmatprep.subr.mxu0 0.0
    %1028 = vmatpush1.msra.mxu0 %v994
    %1029 = vmatprep.subr.mxu0 0.0
    %1030 = vmatpush1.msra.mxu0 %v989
    %1031 = vmatprep.subr.mxu0 0.0
    %1032 = vmatpush1.msra.mxu0 %v984
    %1033 = vmatprep.subr.mxu0 0.0
    %1034 = vmatpush1.msra.mxu0 %v979
    %1035 = vmatprep.subr.mxu0 0.0
    %1036 = vmatpush1.msra.mxu0 %v974
    %1037 = vmatprep.subr.mxu0 0.0
    %1038 = vmatpush1.msra.mxu0 %v969
    %1039 = vmatprep.subr.mxu0 0.0
    %1040 = vmatpush1.msra.mxu0 %v964
    %1041 = vmatprep.subr.mxu0 0.0
    %1042 = vmatpush2.msra.mxu0 0.0
    %1043 = vmatprep.subr.mxu0 0.0
    %1044 = vmatpush2.msra.mxu0 0.0
    %1045 = vmatprep.subr.mxu0 0.0
    %1046 = vmatpush2.msra.mxu0 0.0
    %1047 = vmatprep.subr.mxu0 0.0
    %1048 = vmatpush2.msra.mxu0 0.0
    %1049 = vmatprep.subr.mxu0 0.0
    %1050 = vmatpush2.msra.mxu0 0.0
    %1051 = vmatprep.subr.mxu0 0.0
    %1052 = vmatpush2.msra.mxu0 0.0
    %1053 = vmatprep.subr.mxu0 0.0
    %1054 = vmatpush2.msra.mxu0 0.0
    %1055 = vmatprep.subr.mxu0 0.0
    %1056 = vmatpush2.msra.mxu0 0.0
    %1057 = vmatprep.subr.mxu0 0.0
    %1058 = vmatpush2.msra.mxu0 0.0
    %1059 = vmatprep.subr.mxu0 0.0
    %1060 = vmatpush2.msra.mxu0 0.0
    %1061 = vmatprep.subr.mxu0 0.0
    %1062 = vmatpush2.msra.mxu0 0.0
    %1063 = vmatprep.subr.mxu0 0.0
    %1064 = vmatpush2.msra.mxu0 0.0
    %1065 = vmatprep.subr.mxu0 0.0
    %1066 = vmatpush2.msra.mxu0 0.0
    %1067 = vmatprep.subr.mxu0 0.0
    %1068 = vmatpush2.msra.mxu0 0.0
    %1069 = vmatprep.subr.mxu0 0.0
    %1070 = vmatpush2.msra.mxu0 0.0
    %1071 = vmatprep.subr.mxu0 0.0
    %1072 = vmatpush2.msra.mxu0 0.0
    %1073 = vmatprep.mubr.f32.mxu0 0.0
    %1074 = vmatmul.mubr.f32.gmra.mxu0 %v235
    %v1075 = vpop.f32.mrf.mxu0
    %v1076 = vadd.f32 %v1007, %v1075
    %v1077 = vpop.f32.mrf.mxu0
    %1078 = vmatprep.mubr.f32.mxu0 0.0
    %1079 = vmatmul.mubr.f32.gmra.mxu0 %v238
    %v1080 = vpop.f32.mrf.mxu0
    %v1081 = vadd.f32 %v1007, %v1080
    %v1082 = vpop.f32.mrf.mxu0
    %1083 = vmatprep.mubr.f32.mxu0 0.0
    %1084 = vmatmul.mubr.f32.gmra.mxu0 %v241
    %v1085 = vpop.f32.mrf.mxu0
    %v1086 = vadd.f32 %v1007, %v1085
    %v1087 = vpop.f32.mrf.mxu0
    %1088 = vmatprep.mubr.f32.mxu0 0.0
    %1089 = vmatmul.mubr.f32.gmra.mxu0 %v244
    %v1090 = vpop.f32.mrf.mxu0
    %v1091 = vadd.f32 %v1007, %v1090
    %v1092 = vpop.f32.mrf.mxu0
    %1093 = vmatprep.mubr.f32.mxu0 0.0
    %1094 = vmatmul.mubr.f32.gmra.mxu0 %v247
    %v1095 = vpop.f32.mrf.mxu0
    %v1096 = vadd.f32 %v1007, %v1095
    %v1097 = vpop.f32.mrf.mxu0
    %1098 = vmatprep.mubr.f32.mxu0 0.0
    %1099 = vmatmul.mubr.f32.gmra.mxu0 %v250
    %v1100 = vpop.f32.mrf.mxu0
    %v1101 = vadd.f32 %v1007, %v1100
    %v1102 = vpop.f32.mrf.mxu0
    %1103 = vmatprep.mubr.f32.mxu0 0.0
    %1104 = vmatmul.mubr.f32.gmra.mxu0 %v253
    %v1105 = vpop.f32.mrf.mxu0
    %v1106 = vadd.f32 %v1007, %v1105
    %v1107 = vpop.f32.mrf.mxu0
    %1108 = vmatprep.mubr.f32.mxu0 0.0
    %1109 = vmatmul.mubr.f32.gmra.mxu0 %v256
    %v1110 = vpop.f32.mrf.mxu0
    %v1111 = vadd.f32 %v1007, %v1110
    %v1112 = vpop.f32.mrf.mxu0
    %1113 = vdwg.mxu0
    %v1114 = vadd.f32 %v1076, %v76
    %v1115 = vadd.f32 %v1081, %v77
    %v1116 = vadd.f32 %v1086, %v78
    %v1117 = vadd.f32 %v1091, %v79
    %v1118 = vadd.f32 %v1096, %v80
    %v1119 = vadd.f32 %v1101, %v81
    %v1120 = vadd.f32 %v1106, %v82
    %v1121 = vadd.f32 %v1111, %v83
    %1122 = vst.msk [vmem:[%s10] sm:$0xff] %vm96, %v1114
    %1123 = vst.msk [vmem:[%s10 + $0x8] sm:$0xff] %vm96, %v1115
    %1124 = vst.msk [vmem:[%s10 + $0x10] sm:$0xff] %vm96, %v1116
    %1125 = vst.msk [vmem:[%s10 + $0x18] sm:$0xff] %vm96, %v1117
    %1126 = vst.msk [vmem:[%s10 + $0x20] sm:$0xff] %vm96, %v1118
    %1127 = vst.msk [vmem:[%s10 + $0x28] sm:$0xff] %vm96, %v1119
    %1128 = vst.msk [vmem:[%s10 + $0x30] sm:$0xff] %vm96, %v1120
    %1129 = vst.msk [vmem:[%s10 + $0x38] sm:$0xff] %vm96, %v1121
    // Predicated region
    $region54: #{res_normal_forward.1} parent=1 // pred_check
      _
    $region55: #{res_normal_forward.1} parent=1 // pred_check_branch
      %1131 = sbr.rel (0) target = $region57
    $region56: #{res_normal_forward.1} parent=1 // pred_region
      _
    $region57: #{res_normal_forward.1} parent=1 // pred_fallthru
      _
    // Predicated region
    $region58: #{res_normal_forward.1} parent=1 // pred_check
      _
    $region59: #{res_normal_forward.1} parent=1 // pred_check_branch
      %1133 = sbr.rel (0) target = $region61
    $region60: #{res_normal_forward.1} parent=1 // pred_region
      _
    $region61: #{res_normal_forward.1} parent=1 // pred_fallthru
      _
    %1134 = vsyncpa [#allocation3], 1
    %1135 = vsyncpa [#allocation5], 1

</llo_original>
